<compile_context>
chip_gen: v6e
topology: v6e:2x2x1
jax: 0.10.0
libtpu: 0.0.40
codegen_flags: <defaults>
</compile_context>

<pallas_src>
import math

import jax
import jax.numpy as jnp
from jax.experimental import pallas as pl
from jax.experimental.pallas import tpu as pltpu


def _round_up(x: int, m: int) -> int:
    return ((x + m - 1) // m) * m


def _noisy_linear_kernel(x_ref, wmu_ref, wsig_ref, eps_out_ref, eps_in_ref,
                         beff_ref, o_ref, acc_ref):
    k = pl.program_id(2)

    @pl.when(k == 0)
    def _():
        acc_ref[...] = jnp.zeros_like(acc_ref)

    # Noisy weight tile in the PyTorch (out, in) layout, shape (tn, tk):
    #   w_eff = mu + sigma * (eps_out ⊗ eps_in)
    # eps_out_ref is (tn, 1), eps_in_ref is (1, tk): pure VPU broadcast; the
    # full (out, in) epsilon matrix never exists anywhere.
    w_eff = wmu_ref[...] + wsig_ref[...] * (eps_out_ref[...] * eps_in_ref[...])

    # MXU: (tm, tk) x (tn, tk), contracting both on their minor dim (== x @ W^T).
    # bf16 operands, f32 accumulation; no explicit transpose of the weight tile.
    acc_ref[...] += jax.lax.dot_general(
        x_ref[...].astype(jnp.bfloat16),
        w_eff.astype(jnp.bfloat16),
        dimension_numbers=(((1,), (1,)), ((), ())),
        preferred_element_type=jnp.float32,
    )

    @pl.when(k == pl.num_programs(2) - 1)
    def _():
        o_ref[...] = (acc_ref[...] + beff_ref[...]).astype(o_ref.dtype)


def noisy_linear(x, weight_mu, weight_sigma, bias_mu, bias_sigma,
                 eps_in, eps_out, *, tm_max=128, tn_max=256, tk_max=512):
    """y = x @ (weight_mu + weight_sigma * (eps_out ⊗ eps_in))^T
           + (bias_mu + bias_sigma * eps_out)

    x:            (B, in_features)
    weight_mu/σ:  (out_features, in_features)   (PyTorch layout)
    bias_mu/σ:    (out_features,)
    eps_in:       (in_features,)   factorized noise
    eps_out:      (out_features,)  factorized noise (== bias_epsilon)
    """
    B, K = x.shape
    N, K2 = weight_mu.shape
    assert K2 == K

    # Tile sizes; fall back to the (padded) full extent when the problem is
    # smaller than a tile so small layers stay a single-tile kernel.
    tm = min(tm_max, _round_up(B, 8))
    tn = min(tn_max, _round_up(N, 128))
    tk = min(tk_max, _round_up(K, 128))
    Bp, Np, Kp = _round_up(B, tm), _round_up(N, tn), _round_up(K, tk)

    # Zero-pad to tile multiples: lane-dense (multiple-of-128) output columns,
    # full sublanes on the batch axis.  Padded K contributes zero to the dot;
    # padded N columns / B rows are sliced off below.
    xp = jnp.pad(x, ((0, Bp - B), (0, Kp - K)))
    wmu = jnp.pad(weight_mu, ((0, Np - N), (0, Kp - K)))
    wsig = jnp.pad(weight_sigma, ((0, Np - N), (0, Kp - K)))
    e_in = jnp.pad(eps_in, (0, Kp - K)).reshape(1, Kp)
    e_out = jnp.pad(eps_out, (0, Np - N)).reshape(Np, 1)
    # Fold the bias noise once here (bias_epsilon == eps_out): one tiny stream
    # instead of three, added only on the final K step inside the kernel.
    b_eff = jnp.pad(bias_mu + bias_sigma * eps_out, (0, Np - N)).reshape(1, Np)

    grid = (Bp // tm, Np // tn, Kp // tk)

    out = pl.pallas_call(
        _noisy_linear_kernel,
        out_shape=jax.ShapeDtypeStruct((Bp, Np), x.dtype),
        grid_spec=pltpu.PrefetchScalarGridSpec(
            num_scalar_prefetch=0,
            grid=grid,
            in_specs=[
                pl.BlockSpec((tm, tk), lambda i, j, k: (i, k)),   # x
                pl.BlockSpec((tn, tk), lambda i, j, k: (j, k)),   # weight_mu
                pl.BlockSpec((tn, tk), lambda i, j, k: (j, k)),   # weight_sigma
                pl.BlockSpec((tn, 1), lambda i, j, k: (j, 0)),    # eps_out
                pl.BlockSpec((1, tk), lambda i, j, k: (0, k)),    # eps_in
                pl.BlockSpec((1, tn), lambda i, j, k: (0, j)),    # b_eff
            ],
            out_specs=pl.BlockSpec((tm, tn), lambda i, j, k: (i, j)),
            scratch_shapes=[pltpu.VMEM((tm, tn), jnp.float32)],
        ),
        compiler_params=pltpu.CompilerParams(
            # batch/out tiles are independent -> shard across v7x's 2 TCs;
            # the K reduction axis must stay "arbitrary".
            dimension_semantics=("parallel", "parallel", "arbitrary")),
    )(xp, wmu, wsig, e_out, e_in, b_eff)

    return out[:B, :N]


def scale_noise(key, size):
    """Factorized gaussian noise: sign(x) * sqrt(|x|), x ~ N(0, 1)."""
    x = jax.random.normal(key, (size,), dtype=jnp.float32)
    return jnp.sign(x) * jnp.sqrt(jnp.abs(x))


def init_noisy_linear_params(key, in_features, out_features, std_init=0.5):
    """Parameter / factorized-noise init mirroring the PyTorch module.

    Returns (weight_mu, weight_sigma, bias_mu, bias_sigma, eps_in, eps_out).
    The module's buffers are weight_epsilon = outer(eps_out, eps_in) and
    bias_epsilon = eps_out; we keep the factorized form so the kernel never
    has to stream the full epsilon matrix.
    """
    k_wmu, k_bmu, k_ein, k_eout = jax.random.split(key, 4)
    mu_range = 1.0 / math.sqrt(in_features)

    weight_mu = jax.random.uniform(
        k_wmu, (out_features, in_features),
        minval=-mu_range, maxval=mu_range, dtype=jnp.float32)
    weight_sigma = jnp.full((out_features, in_features),
                            std_init / math.sqrt(in_features), dtype=jnp.float32)
    bias_mu = jax.random.uniform(
        k_bmu, (out_features,), minval=-mu_range, maxval=mu_range,
        dtype=jnp.float32)
    bias_sigma = jnp.full((out_features,),
                          std_init / math.sqrt(out_features), dtype=jnp.float32)

    eps_in = scale_noise(k_ein, in_features)     # (in,)
    eps_out = scale_noise(k_eout, out_features)  # (out,)

    return weight_mu, weight_sigma, bias_mu, bias_sigma, eps_in, eps_out


if __name__ == "__main__":
    in_features, out_features, batch = 32, 64, 8

    key = jax.random.PRNGKey(0)
    k_params, k_x = jax.random.split(key)
    wmu, wsig, bmu, bsig, eps_in, eps_out = init_noisy_linear_params(
        k_params, in_features, out_features)
    x = jax.random.normal(k_x, (batch, in_features), dtype=jnp.float32)

    y = noisy_linear(x, wmu, wsig, bmu, bsig, eps_in, eps_out)
    y = jax.block_until_ready(y)

    # Pure-JAX f32 reference of the module forward (materializes the outer
    # product only for the check).  Tolerance loosened for the bf16 MXU path.
    w_eff_ref = wmu + wsig * jnp.outer(eps_out, eps_in)
    b_eff_ref = bmu + bsig * eps_out
    y_ref = x @ w_eff_ref.T + b_eff_ref

    assert y.shape == (batch, out_features)
    assert jnp.allclose(y, y_ref, atol=5e-2, rtol=5e-2), (
        float(jnp.max(jnp.abs(y - y_ref))))

    print("KERNEL_OK")
</pallas_src>

<mosaic_0001>
module attributes {stable_mosaic.version = 11 : i64} {
  func.func @_noisy_linear_kernel(%arg0: i32, %arg1: i32, %arg2: i32, %arg3: memref<8x128xf32, #tpu.memory_space<vmem>>, %arg4: memref<128x128xf32, #tpu.memory_space<vmem>>, %arg5: memref<128x128xf32, #tpu.memory_space<vmem>>, %arg6: memref<128x1xf32, #tpu.memory_space<vmem>>, %arg7: memref<1x128xf32, #tpu.memory_space<vmem>>, %arg8: memref<1x128xf32, #tpu.memory_space<vmem>>, %arg9: memref<8x128xf32, #tpu.memory_space<vmem>>, %arg10: memref<8x128xf32, #tpu.memory_space<vmem>>) attributes {dimension_semantics = [#tpu.dimension_semantics<parallel>, #tpu.dimension_semantics<parallel>, #tpu.dimension_semantics<arbitrary>], iteration_bounds = array<i64: 1, 1, 1>, scalar_prefetch = 0 : i64, scratch_operands = 1 : i64, tpu.core_type = #tpu.core_type<tc>, window_params = [{transform_indices = @transform_0, window_bounds = array<i64: 8, 128>}, {transform_indices = @transform_1, window_bounds = array<i64: 128, 128>}, {transform_indices = @transform_2, window_bounds = array<i64: 128, 128>}, {transform_indices = @transform_3, window_bounds = array<i64: 128, 1>}, {transform_indices = @transform_4, window_bounds = array<i64: 1, 128>}, {transform_indices = @transform_5, window_bounds = array<i64: 1, 128>}, {transform_indices = @transform_6, window_bounds = array<i64: 8, 128>}]} {
    %c0_i32 = arith.constant 0 : i32
    %0 = arith.cmpi eq, %arg2, %c0_i32 : i32
    %1 = arith.extui %0 : i1 to i32
    %c0_i32_0 = arith.constant 0 : i32
    %2 = arith.cmpi ne, %1, %c0_i32_0 : i32
    scf.if %2 {
      %cst_16 = arith.constant 0.000000e+00 : f32
      %22 = vector.broadcast %cst_16 : f32 to vector<8x128xf32>
      %c0_17 = arith.constant 0 : index
      %c0_18 = arith.constant 0 : index
      %23 = vector.load %arg10[%c0_17, %c0_18] : memref<8x128xf32, #tpu.memory_space<vmem>>, vector<8x128xf32>
      tpu.vector_store %arg10[%c0_17, %c0_18], %22 {strides = array<i32>} : memref<8x128xf32, #tpu.memory_space<vmem>>, vector<8x128xf32>,
    } else {
    }
    %c0 = arith.constant 0 : index
    %c0_1 = arith.constant 0 : index
    %3 = vector.load %arg4[%c0, %c0_1] : memref<128x128xf32, #tpu.memory_space<vmem>>, vector<128x128xf32>
    %c0_2 = arith.constant 0 : index
    %c0_3 = arith.constant 0 : index
    %4 = vector.load %arg5[%c0_2, %c0_3] : memref<128x128xf32, #tpu.memory_space<vmem>>, vector<128x128xf32>
    %c0_4 = arith.constant 0 : index
    %c0_5 = arith.constant 0 : index
    %5 = vector.load %arg6[%c0_4, %c0_5] : memref<128x1xf32, #tpu.memory_space<vmem>>, vector<128x1xf32>
    %c0_6 = arith.constant 0 : index
    %c0_7 = arith.constant 0 : index
    %6 = vector.load %arg7[%c0_6, %c0_7] : memref<1x128xf32, #tpu.memory_space<vmem>>, vector<1x128xf32>
    %7 = vector.broadcast %5 : vector<128x1xf32> to vector<128x128xf32>
    %8 = vector.broadcast %6 : vector<1x128xf32> to vector<128x128xf32>
    %9 = arith.mulf %7, %8 : vector<128x128xf32>
    %10 = arith.mulf %4, %9 : vector<128x128xf32>
    %11 = arith.addf %3, %10 : vector<128x128xf32>
    %c0_8 = arith.constant 0 : index
    %c0_9 = arith.constant 0 : index
    %12 = vector.load %arg10[%c0_8, %c0_9] : memref<8x128xf32, #tpu.memory_space<vmem>>, vector<8x128xf32>
    %c0_10 = arith.constant 0 : index
    %c0_11 = arith.constant 0 : index
    %13 = vector.load %arg3[%c0_10, %c0_11] : memref<8x128xf32, #tpu.memory_space<vmem>>, vector<8x128xf32>
    %14 = arith.truncf %13 : vector<8x128xf32> to vector<8x128xbf16>
    %15 = arith.truncf %11 : vector<128x128xf32> to vector<128x128xbf16>
    %cst = arith.constant dense<0.000000e+00> : vector<8x128xf32>
    %16 = tpu.matmul %14, %15, %cst {dimension_numbers = #tpu.dot_dimension_numbers<[1], [1], [0], [0], [0, 0, 1, 0], [], []>} : vector<8x128xbf16>, vector<128x128xbf16>, vector<8x128xf32> -> vector<8x128xf32>
    %17 = arith.addf %12, %16 : vector<8x128xf32>
    %c0_12 = arith.constant 0 : index
    %c0_13 = arith.constant 0 : index
    %18 = vector.load %arg10[%c0_12, %c0_13] : memref<8x128xf32, #tpu.memory_space<vmem>>, vector<8x128xf32>
    tpu.vector_store %arg10[%c0_12, %c0_13], %17 {strides = array<i32>} : memref<8x128xf32, #tpu.memory_space<vmem>>, vector<8x128xf32>,
    %c0_i32_14 = arith.constant 0 : i32
    %19 = arith.cmpi eq, %arg2, %c0_i32_14 : i32
    %20 = arith.extui %19 : i1 to i32
    %c0_i32_15 = arith.constant 0 : i32
    %21 = arith.cmpi ne, %20, %c0_i32_15 : i32
    scf.if %21 {
      %c0_16 = arith.constant 0 : index
      %c0_17 = arith.constant 0 : index
      %22 = vector.load %arg10[%c0_16, %c0_17] : memref<8x128xf32, #tpu.memory_space<vmem>>, vector<8x128xf32>
      %c0_18 = arith.constant 0 : index
      %c0_19 = arith.constant 0 : index
      %23 = vector.load %arg8[%c0_18, %c0_19] : memref<1x128xf32, #tpu.memory_space<vmem>>, vector<1x128xf32>
      %24 = vector.broadcast %23 : vector<1x128xf32> to vector<8x128xf32>
      %25 = arith.addf %22, %24 : vector<8x128xf32>
      %c0_20 = arith.constant 0 : index
      %c0_21 = arith.constant 0 : index
      %26 = vector.load %arg9[%c0_20, %c0_21] : memref<8x128xf32, #tpu.memory_space<vmem>>, vector<8x128xf32>
      tpu.vector_store %arg9[%c0_20, %c0_21], %25 {strides = array<i32>} : memref<8x128xf32, #tpu.memory_space<vmem>>, vector<8x128xf32>,
    } else {
    }
    return
  }
  func.func @transform_0(%arg0: i32, %arg1: i32, %arg2: i32) -> (i32, i32) {
    %c0_i32 = arith.constant 0 : i32
    return %arg0, %arg2 : i32, i32
  }
  func.func @transform_1(%arg0: i32, %arg1: i32, %arg2: i32) -> (i32, i32) {
    %c0_i32 = arith.constant 0 : i32
    return %arg1, %arg2 : i32, i32
  }
  func.func @transform_2(%arg0: i32, %arg1: i32, %arg2: i32) -> (i32, i32) {
    %c0_i32 = arith.constant 0 : i32
    return %arg1, %arg2 : i32, i32
  }
  func.func @transform_3(%arg0: i32, %arg1: i32, %arg2: i32) -> (i32, i32) {
    %c0_i32 = arith.constant 0 : i32
    %c0_i32_0 = arith.constant 0 : i32
    return %arg1, %c0_i32 : i32, i32
  }
  func.func @transform_4(%arg0: i32, %arg1: i32, %arg2: i32) -> (i32, i32) {
    %c0_i32 = arith.constant 0 : i32
    %c0_i32_0 = arith.constant 0 : i32
    return %c0_i32, %arg2 : i32, i32
  }
  func.func @transform_5(%arg0: i32, %arg1: i32, %arg2: i32) -> (i32, i32) {
    %c0_i32 = arith.constant 0 : i32
    %c0_i32_0 = arith.constant 0 : i32
    return %c0_i32, %arg1 : i32, i32
  }
  func.func @transform_6(%arg0: i32, %arg1: i32, %arg2: i32) -> (i32, i32) {
    %c0_i32 = arith.constant 0 : i32
    return %arg0, %arg1 : i32, i32
  }
}

</mosaic_0001>

<llo_original>
// kernel: tpu_custom_call.1
$region0: #{tpu_custom_call.1}
  #allocation0 [shape = 'u32[]', space=smem, size = 0x4, offset = 0x4, fixed_abs, tag = 'smem constant byte address 0x4 - core index']
  #allocation1 [shape = 'u32[144,128]{1,0:T(1,128)}', space=vmem, size = 0x12000, scoped, tag = 'internal scratch']
  #allocation2 [shape = 'f32[8,128]{1,0:T(8,128)}', space=vmem, size = 0x1000, scoped, tag = 'scratch operand']
  %s0 = inlined_call_operand.hbm [shape: f32[8,128], index: 0, kind: input, shape index: {}]
  %s1 = inlined_call_operand.vmem [shape: f32[128,128], index: 1, kind: input, shape index: {}]
  %s2 = inlined_call_operand.hbm [shape: f32[128,128], index: 2, kind: input, shape index: {}]
  %s3 = inlined_call_operand.vmem [shape: f32[128,1], index: 3, kind: input, shape index: {}]
  %s4 = inlined_call_operand.vmem [shape: f32[1,128], index: 4, kind: input, shape index: {}]
  %s5 = inlined_call_operand.vmem [shape: f32[1,128], index: 5, kind: input, shape index: {}]
  %s6 = inlined_call_operand.hbm [shape: f32[8,128], index: 6, kind: output, shape index: {}]
  %s7 = sld [smem:[#allocation0]]
  $region50: #{tpu_custom_call.1} parent=0
    _
  %s9 = ssub.s32 1, %s7
  %s10 = scalar_select 0, %s9, %s7
  $region1: #{tpu_custom_call.1} parent=0
    #allocation3 [shape = 'u8[4096]{0}', space=vmem, size = 0x1000, scoped, tag = 'input window, operand 0, single buffered']
    #allocation4 [shape = 's32[1]{0}', space=sflag, size = 0x4, scoped, tag = 'scoped memory for tpu_custom_call.1']
    #allocation5 [shape = 's32[1]{0}', space=sflag, size = 0x4, scoped, tag = 'scoped memory for tpu_custom_call.1']
    #allocation6 [shape = 'u8[65536]{0}', space=vmem, size = 0x10000, scoped, tag = 'input window, operand 2, single buffered']
    #allocation7 [shape = 's32[1]{0}', space=sflag, size = 0x4, scoped, tag = 'scoped memory for tpu_custom_call.1']
    #allocation8 [shape = 'u8[4096]{0}', space=vmem, size = 0x1000, scoped, tag = 'output window, operand 0, single buffered']
    %11 = vsyncpa [#allocation4], 0
    %12 = vsyncpa [#allocation7], 0
    %13 = vsyncpa [#allocation5], 0
    // Predicated region
    $region2: #{tpu_custom_call.1} parent=1 // pred_check
      _
    $region3: #{tpu_custom_call.1} parent=1 // pred_check_branch
      %15 = sbr.rel (0) target = $region5
    $region4: #{tpu_custom_call.1} parent=1 // pred_region
      %s17 = ssub.s32 128, 128
      %18 = vsyncadd [#allocation4], %s17
      %s20 = sshll.u32 [#allocation3], 4
      %s21 = int_to_ptr.vmem [resolvable:$true] %s20
      %23 = dma.hbm_to_vmem [thread:$0]  %s0, 128, %s21, [#allocation4]
    $region5: #{tpu_custom_call.1} parent=1 // pred_fallthru
      _
    // Predicated region
    $region6: #{tpu_custom_call.1} parent=1 // pred_check
      _
    $region7: #{tpu_custom_call.1} parent=1 // pred_check_branch
      %25 = sbr.rel (0) target = $region9
    $region8: #{tpu_custom_call.1} parent=1 // pred_region
      _
    $region9: #{tpu_custom_call.1} parent=1 // pred_fallthru
      _
    // Predicated region
    $region10: #{tpu_custom_call.1} parent=1 // pred_check
      _
    $region11: #{tpu_custom_call.1} parent=1 // pred_check_branch
      %27 = sbr.rel (0) target = $region13
    $region12: #{tpu_custom_call.1} parent=1 // pred_region
      %s29 = ssub.s32 2048, 2048
      %30 = vsyncadd [#allocation7], %s29
      %s31 = sshll.u32 [#allocation6], 4
      %s32 = int_to_ptr.vmem [resolvable:$true] %s31
      %37 = dma.hbm_to_vmem [thread:$0]  %s2, 2048, %s32, [#allocation7], 128, 128, 8
    $region13: #{tpu_custom_call.1} parent=1 // pred_fallthru
      _
    // Predicated region
    $region14: #{tpu_custom_call.1} parent=1 // pred_check
      _
    $region15: #{tpu_custom_call.1} parent=1 // pred_check_branch
      %39 = sbr.rel (0) target = $region17
    $region16: #{tpu_custom_call.1} parent=1 // pred_region
      _
    $region17: #{tpu_custom_call.1} parent=1 // pred_fallthru
      _
    // Predicated region
    $region18: #{tpu_custom_call.1} parent=1 // pred_check
      _
    $region19: #{tpu_custom_call.1} parent=1 // pred_check_branch
      %41 = sbr.rel (0) target = $region21
    $region20: #{tpu_custom_call.1} parent=1 // pred_region
      _
    $region21: #{tpu_custom_call.1} parent=1 // pred_fallthru
      _
    // Predicated region
    $region22: #{tpu_custom_call.1} parent=1 // pred_check
      _
    $region23: #{tpu_custom_call.1} parent=1 // pred_check_branch
      %43 = sbr.rel (0) target = $region25
    $region24: #{tpu_custom_call.1} parent=1 // pred_region
      _
    $region25: #{tpu_custom_call.1} parent=1 // pred_fallthru
      _
    // Predicated region
    $region26: #{tpu_custom_call.1} parent=1 // pred_check
      _
    $region27: #{tpu_custom_call.1} parent=1 // pred_check_branch
      %45 = sbr.rel (0) target = $region29
    $region28: #{tpu_custom_call.1} parent=1 // pred_region
      %46 = dma.done [#allocation4], 128
    $region29: #{tpu_custom_call.1} parent=1 // pred_fallthru
      _
    // Predicated region
    $region30: #{tpu_custom_call.1} parent=1 // pred_check
      _
    $region31: #{tpu_custom_call.1} parent=1 // pred_check_branch
      %48 = sbr.rel (0) target = $region33
    $region32: #{tpu_custom_call.1} parent=1 // pred_region
      %49 = dma.done [#allocation7], 2048
    $region33: #{tpu_custom_call.1} parent=1 // pred_fallthru
      _
    %p51 = scmp.eq.s32.totalorder 0, 0
    // Predicated region
    $region34: #{tpu_custom_call.1} parent=1 // pred_check
      %p52 = pneg %p51
    $region35: #{tpu_custom_call.1} parent=1 // pred_check_branch
      %54 = sbr.rel (%p52) target = $region37
    $region36: #{tpu_custom_call.1} parent=1 // pred_region
      %55 = vst [vmem:[#allocation2] sm:$0xff] 0.0
    $region37: #{tpu_custom_call.1} parent=1 // pred_fallthru
      _
    %v56 = vld [vmem:[%s1] sm:$0xff]
    %v57 = vld [vmem:[%s1 + $0x8] sm:$0xff]
    %v58 = vld [vmem:[%s1 + $0x10] sm:$0xff]
    %v59 = vld [vmem:[%s1 + $0x18] sm:$0xff]
    %v60 = vld [vmem:[%s1 + $0x20] sm:$0xff]
    %v61 = vld [vmem:[%s1 + $0x28] sm:$0xff]
    %v62 = vld [vmem:[%s1 + $0x30] sm:$0xff]
    %v63 = vld [vmem:[%s1 + $0x38] sm:$0xff]
    %v64 = vld [vmem:[%s1 + $0x40] sm:$0xff]
    %v65 = vld [vmem:[%s1 + $0x48] sm:$0xff]
    %v66 = vld [vmem:[%s1 + $0x50] sm:$0xff]
    %v67 = vld [vmem:[%s1 + $0x58] sm:$0xff]
    %v68 = vld [vmem:[%s1 + $0x60] sm:$0xff]
    %v69 = vld [vmem:[%s1 + $0x68] sm:$0xff]
    %v70 = vld [vmem:[%s1 + $0x70] sm:$0xff]
    %v71 = vld [vmem:[%s1 + $0x78] sm:$0xff]
    %v72 = vld [vmem:[#allocation6] sm:$0xff]
    %v73 = vld [vmem:[#allocation6 + $0x8] sm:$0xff]
    %v74 = vld [vmem:[#allocation6 + $0x10] sm:$0xff]
    %v75 = vld [vmem:[#allocation6 + $0x18] sm:$0xff]
    %v76 = vld [vmem:[#allocation6 + $0x20] sm:$0xff]
    %v77 = vld [vmem:[#allocation6 + $0x28] sm:$0xff]
    %v78 = vld [vmem:[#allocation6 + $0x30] sm:$0xff]
    %v79 = vld [vmem:[#allocation6 + $0x38] sm:$0xff]
    %v80 = vld [vmem:[#allocation6 + $0x40] sm:$0xff]
    %v81 = vld [vmem:[#allocation6 + $0x48] sm:$0xff]
    %v82 = vld [vmem:[#allocation6 + $0x50] sm:$0xff]
    %v83 = vld [vmem:[#allocation6 + $0x58] sm:$0xff]
    %v84 = vld [vmem:[#allocation6 + $0x60] sm:$0xff]
    %v85 = vld [vmem:[#allocation6 + $0x68] sm:$0xff]
    %v86 = vld [vmem:[#allocation6 + $0x70] sm:$0xff]
    %v87 = vld [vmem:[#allocation6 + $0x78] sm:$0xff]
    %v88 = vld [vmem:[%s3] sm:$0xff]
    %v89 = vld [vmem:[%s3 + $0x8] sm:$0xff]
    %v90 = vld [vmem:[%s3 + $0x10] sm:$0xff]
    %v91 = vld [vmem:[%s3 + $0x18] sm:$0xff]
    %v92 = vld [vmem:[%s3 + $0x20] sm:$0xff]
    %v93 = vld [vmem:[%s3 + $0x28] sm:$0xff]
    %v94 = vld [vmem:[%s3 + $0x30] sm:$0xff]
    %v95 = vld [vmem:[%s3 + $0x38] sm:$0xff]
    %v96 = vld [vmem:[%s3 + $0x40] sm:$0xff]
    %v97 = vld [vmem:[%s3 + $0x48] sm:$0xff]
    %v98 = vld [vmem:[%s3 + $0x50] sm:$0xff]
    %v99 = vld [vmem:[%s3 + $0x58] sm:$0xff]
    %v100 = vld [vmem:[%s3 + $0x60] sm:$0xff]
    %v101 = vld [vmem:[%s3 + $0x68] sm:$0xff]
    %v102 = vld [vmem:[%s3 + $0x70] sm:$0xff]
    %v103 = vld [vmem:[%s3 + $0x78] sm:$0xff]
    %v104 = vld [vmem:[%s4] sm:$0x1]
    %106 = vset.pattern.permute.xlu0 0
    %107 = vperm.xlu0 %106, %v88
    %v108 = vpop.permute.xlu0 %107
    %111 = vset.pattern.permute.xlu0 0
    %112 = vperm.xlu0 %111, %v89
    %v113 = vpop.permute.xlu0 %112
    %116 = vset.pattern.permute.xlu0 0
    %117 = vperm.xlu0 %116, %v90
    %v118 = vpop.permute.xlu0 %117
    %121 = vset.pattern.permute.xlu0 0
    %122 = vperm.xlu0 %121, %v91
    %v123 = vpop.permute.xlu0 %122
    %126 = vset.pattern.permute.xlu0 0
    %127 = vperm.xlu0 %126, %v92
    %v128 = vpop.permute.xlu0 %127
    %131 = vset.pattern.permute.xlu0 0
    %132 = vperm.xlu0 %131, %v93
    %v133 = vpop.permute.xlu0 %132
    %136 = vset.pattern.permute.xlu0 0
    %137 = vperm.xlu0 %136, %v94
    %v138 = vpop.permute.xlu0 %137
    %141 = vset.pattern.permute.xlu0 0
    %142 = vperm.xlu0 %141, %v95
    %v143 = vpop.permute.xlu0 %142
    %146 = vset.pattern.permute.xlu0 0
    %147 = vperm.xlu0 %146, %v96
    %v148 = vpop.permute.xlu0 %147
    %151 = vset.pattern.permute.xlu0 0
    %152 = vperm.xlu0 %151, %v97
    %v153 = vpop.permute.xlu0 %152
    %156 = vset.pattern.permute.xlu0 0
    %157 = vperm.xlu0 %156, %v98
    %v158 = vpop.permute.xlu0 %157
    %161 = vset.pattern.permute.xlu0 0
    %162 = vperm.xlu0 %161, %v99
    %v163 = vpop.permute.xlu0 %162
    %166 = vset.pattern.permute.xlu0 0
    %167 = vperm.xlu0 %166, %v100
    %v168 = vpop.permute.xlu0 %167
    %171 = vset.pattern.permute.xlu0 0
    %172 = vperm.xlu0 %171, %v101
    %v173 = vpop.permute.xlu0 %172
    %176 = vset.pattern.permute.xlu0 0
    %177 = vperm.xlu0 %176, %v102
    %v178 = vpop.permute.xlu0 %177
    %181 = vset.pattern.permute.xlu0 0
    %182 = vperm.xlu0 %181, %v103
    %v183 = vpop.permute.xlu0 %182
    %v186 = vlaneseq
    %v187 = vshrl.u32 %v186, 7
    %v188 = vsub.s32 0, %v187
    %v189 = vrot.slane %v104, %v188
    %v191 = vmul.f32 %v108, %v189
    %v192 = vmul.f32 %v113, %v189
    %v193 = vmul.f32 %v118, %v189
    %v194 = vmul.f32 %v123, %v189
    %v195 = vmul.f32 %v128, %v189
    %v196 = vmul.f32 %v133, %v189
    %v197 = vmul.f32 %v138, %v189
    %v198 = vmul.f32 %v143, %v189
    %v199 = vmul.f32 %v148, %v189
    %v200 = vmul.f32 %v153, %v189
    %v201 = vmul.f32 %v158, %v189
    %v202 = vmul.f32 %v163, %v189
    %v203 = vmul.f32 %v168, %v189
    %v204 = vmul.f32 %v173, %v189
    %v205 = vmul.f32 %v178, %v189
    %v206 = vmul.f32 %v183, %v189
    %v207 = vmul.f32 %v72, %v191
    %v208 = vmul.f32 %v73, %v192
    %v209 = vmul.f32 %v74, %v193
    %v210 = vmul.f32 %v75, %v194
    %v211 = vmul.f32 %v76, %v195
    %v212 = vmul.f32 %v77, %v196
    %v213 = vmul.f32 %v78, %v197
    %v214 = vmul.f32 %v79, %v198
    %v215 = vmul.f32 %v80, %v199
    %v216 = vmul.f32 %v81, %v200
    %v217 = vmul.f32 %v82, %v201
    %v218 = vmul.f32 %v83, %v202
    %v219 = vmul.f32 %v84, %v203
    %v220 = vmul.f32 %v85, %v204
    %v221 = vmul.f32 %v86, %v205
    %v222 = vmul.f32 %v87, %v206
    %v223 = vadd.f32 %v56, %v207
    %v224 = vadd.f32 %v57, %v208
    %v225 = vadd.f32 %v58, %v209
    %v226 = vadd.f32 %v59, %v210
    %v227 = vadd.f32 %v60, %v211
    %v228 = vadd.f32 %v61, %v212
    %v229 = vadd.f32 %v62, %v213
    %v230 = vadd.f32 %v63, %v214
    %v231 = vadd.f32 %v64, %v215
    %v232 = vadd.f32 %v65, %v216
    %v233 = vadd.f32 %v66, %v217
    %v234 = vadd.f32 %v67, %v218
    %v235 = vadd.f32 %v68, %v219
    %v236 = vadd.f32 %v69, %v220
    %v237 = vadd.f32 %v70, %v221
    %v238 = vadd.f32 %v71, %v222
    %v239 = vld [vmem:[#allocation2] sm:$0xff]
    %v240 = vld [vmem:[#allocation3] sm:$0xff]
    %v241 = vpack.c.bf16 %v240, %v240
    %v242 = vpack.c.bf16 %v224, %v223
    %v243 = vpack.c.bf16 %v226, %v225
    %v244 = vpack.c.bf16 %v228, %v227
    %v245 = vpack.c.bf16 %v230, %v229
    %v246 = vpack.c.bf16 %v232, %v231
    %v247 = vpack.c.bf16 %v234, %v233
    %v248 = vpack.c.bf16 %v236, %v235
    %v249 = vpack.c.bf16 %v238, %v237
    %250 = vmatprep.subr.bf16.mxu0 0
    %251 = vmatpush1.bf16.xpose.msra.mxu0 %v249
    %252 = vmatprep.subr.bf16.mxu0 0
    %253 = vmatpush1.bf16.xpose.msra.mxu0 %v248
    %254 = vmatprep.subr.bf16.mxu0 0
    %255 = vmatpush1.bf16.xpose.msra.mxu0 %v247
    %256 = vmatprep.subr.bf16.mxu0 0
    %257 = vmatpush1.bf16.xpose.msra.mxu0 %v246
    %258 = vmatprep.subr.bf16.mxu0 0
    %259 = vmatpush1.bf16.xpose.msra.mxu0 %v245
    %260 = vmatprep.subr.bf16.mxu0 0
    %261 = vmatpush1.bf16.xpose.msra.mxu0 %v244
    %262 = vmatprep.subr.bf16.mxu0 0
    %263 = vmatpush1.bf16.xpose.msra.mxu0 %v243
    %264 = vmatprep.subr.bf16.mxu0 0
    %265 = vmatpush1.bf16.xpose.msra.mxu0 %v242
    %266 = vmatprep.subr.bf16.mxu0 0
    %267 = vmatpush2.bf16.xpose.msra.mxu0 0
    %268 = vmatprep.subr.bf16.mxu0 0
    %269 = vmatpush2.bf16.xpose.msra.mxu0 0
    %270 = vmatprep.subr.bf16.mxu0 0
    %271 = vmatpush2.bf16.xpose.msra.mxu0 0
    %272 = vmatprep.subr.bf16.mxu0 0
    %273 = vmatpush2.bf16.xpose.msra.mxu0 0
    %274 = vmatprep.subr.bf16.mxu0 0
    %275 = vmatpush2.bf16.xpose.msra.mxu0 0
    %276 = vmatprep.subr.bf16.mxu0 0
    %277 = vmatpush2.bf16.xpose.msra.mxu0 0
    %278 = vmatprep.subr.bf16.mxu0 0
    %279 = vmatpush2.bf16.xpose.msra.mxu0 0
    %280 = vmatprep.subr.bf16.mxu0 0
    %281 = vmatpush2.bf16.xpose.msra.mxu0 0
    %282 = vmatprep.mubr.bf16.mxu0 0
    %283 = vmatmul.mubr.bf16.gmra.mxu0 %v241
    %v284 = vpop.f32.mrf.mxu0
    %v285 = vadd.f32 0.0, %v284
    %v286 = vpop.f32.mrf.mxu0
    %v287 = vpop.f32.mrf.mxu0
    %v288 = vpop.f32.mrf.mxu0
    %289 = vdwg.mxu0
    %v290 = vadd.f32 %v239, %v285
    %291 = vst [vmem:[#allocation2] sm:$0xff] %v290
    // Predicated region
    $region38: #{tpu_custom_call.1} parent=1 // pred_check
      %p292 = pneg %p51
    $region39: #{tpu_custom_call.1} parent=1 // pred_check_branch
      %294 = sbr.rel (%p292) target = $region41
    $region40: #{tpu_custom_call.1} parent=1 // pred_region
      %v295 = vld [vmem:[#allocation2] sm:$0xff]
      %v296 = vld [vmem:[%s5] sm:$0x1]
      %v298 = vlaneseq
      %v299 = vshrl.u32 %v298, 7
      %v300 = vsub.s32 0, %v299
      %v301 = vrot.slane %v296, %v300
      %v303 = vadd.f32 %v295, %v301
      %304 = vst [vmem:[#allocation8] sm:$0xff] %v303
    $region41: #{tpu_custom_call.1} parent=1 // pred_fallthru
      _
    // Predicated region
    $region42: #{tpu_custom_call.1} parent=1 // pred_check
      _
    $region43: #{tpu_custom_call.1} parent=1 // pred_check_branch
      %306 = sbr.rel (0) target = $region45
    $region44: #{tpu_custom_call.1} parent=1 // pred_region
      %s308 = ssub.s32 128, 128
      %309 = vsyncadd [#allocation5], %s308
      %s311 = sshll.u32 [#allocation8], 4
      %s312 = int_to_ptr.vmem [resolvable:$true] %s311
      %314 = dma.vmem_to_hbm [thread:$0]  %s312, 128, %s6, [#allocation5]
    $region45: #{tpu_custom_call.1} parent=1 // pred_fallthru
      _
    // Predicated region
    $region46: #{tpu_custom_call.1} parent=1 // pred_check
      _
    $region47: #{tpu_custom_call.1} parent=1 // pred_check_branch
      %316 = sbr.rel (0) target = $region49
    $region48: #{tpu_custom_call.1} parent=1 // pred_region
      %317 = dma.done [#allocation5], 128
    $region49: #{tpu_custom_call.1} parent=1 // pred_fallthru
      _
    %318 = vsyncpa [#allocation4], 1
    %319 = vsyncpa [#allocation7], 1
    %320 = vsyncpa [#allocation5], 1

</llo_original>
